<compile_context>
chip_gen: v6e
topology: v6e:2x2x1
jax: 0.10.0
libtpu: 0.0.40
codegen_flags: <defaults>
</compile_context>

<pallas_src>
import functools

import jax
import jax.numpy as jnp
from jax.experimental import pallas as pl
from jax.experimental.pallas import tpu as pltpu


def _round_up(n, m):
    return ((n + m - 1) // m) * m


def _fused_linear_kernel(x_ref, w_ref, b_ref, o_ref):
    """y = x @ W + b, with W = W1^T @ W2^T and b = b1 @ W2^T + b2 (precomputed)."""
    x = x_ref[...].astype(w_ref.dtype)
    y = jnp.dot(x, w_ref[...], preferred_element_type=jnp.float32)
    y = y + b_ref[...]                      # f32 bias add (v5e VPU has no bf16)
    o_ref[...] = y.astype(o_ref.dtype)


def prepare_params(w1, b1, w2, b2, compute_dtype=jnp.bfloat16):
    """One-time parameter preparation (hoisted out of the per-call path).

    w1, w2: (H_out, H_in) PyTorch layout; b1, b2: (H,).
    Fuses the two linears in f32, pads the hidden dim to a multiple of 128
    lanes (so output stores are unmasked, lane-dense `vst`), and casts once to
    the MXU compute dtype.
    """
    w1 = jnp.asarray(w1, jnp.float32)
    b1 = jnp.asarray(b1, jnp.float32)
    w2 = jnp.asarray(w2, jnp.float32)
    b2 = jnp.asarray(b2, jnp.float32)

    H = w1.shape[0]
    Hp = _round_up(H, 128)
    pad = Hp - H

    # Exact algebra: (x @ W1^T + b1) @ W2^T + b2 = x @ (W1^T @ W2^T) + (b1 @ W2^T + b2)
    w_fused = w1.T @ w2.T                   # (H, H), f32 combine
    b_fused = b1 @ w2.T + b2                # (H,),   f32

    w_fused = jnp.pad(w_fused, ((0, pad), (0, pad))).astype(compute_dtype)
    b_fused = jnp.pad(b_fused, (0, pad)).reshape(1, Hp).astype(jnp.float32)
    return {"w": w_fused, "b": b_fused}


def _resident_spec(shape):
    # Constant index_map => the block is DMA'd once and stays resident; request
    # single-buffering so the (padded) weight isn't allocated twice in VMEM.
    idx = lambda i: (0,) * len(shape)
    try:
        return pl.BlockSpec(shape, idx, pipeline_mode=pl.Buffered(1))
    except (TypeError, AttributeError):      # older Pallas without pipeline_mode
        return pl.BlockSpec(shape, idx)


@functools.partial(jax.jit, static_argnames=("block_rows",))
def mlp_forward(x, params, block_rows=256):
    """x: (B, H) activations; params: output of prepare_params."""
    B, H = x.shape
    Hp = params["w"].shape[0]                # static padded hidden size
    assert H <= Hp, "activations wider than prepared parameters"

    # Sublane-align the batch only; the grid uses cdiv so a partial last
    # row-tile is masked on store instead of padding up to a full tile.
    b8 = _round_up(B, 8)
    tm = min(block_rows, b8)
    n_row_tiles = pl.cdiv(b8, tm)

    pad_b, pad_h = b8 - B, Hp - H
    xp = jnp.pad(x, ((0, pad_b), (0, pad_h))) if (pad_b or pad_h) else x

    in_bytes = jnp.dtype(x.dtype).itemsize
    w_bytes = jnp.dtype(params["w"].dtype).itemsize

    # Real VMEM footprint: single-buffered fused weight + bias, double-buffered
    # x / out tiles, f32 intermediate.  Raise the scoped-VMEM limit (defaults
    # 16 MiB v5e / 32 MiB v6e,v7x) with 2x headroom, capped at the smallest
    # physical VMEM (64 MiB per TC on v7x).
    footprint = (Hp * Hp * w_bytes + Hp * 4
                 + 2 * tm * Hp * in_bytes        # x tiles (double-buffered)
                 + 2 * tm * Hp * in_bytes        # out tiles (double-buffered)
                 + tm * Hp * 4)                  # f32 intermediate
    vmem_limit = int(min(64 << 20, max(32 << 20, 2 * footprint)))

    cost = pl.CostEstimate(
        flops=2 * b8 * Hp * Hp,
        transcendentals=0,
        bytes_accessed=(b8 * Hp * in_bytes        # x read
                        + Hp * Hp * w_bytes       # fused weight read
                        + Hp * 4                  # bias read
                        + b8 * Hp * in_bytes),    # out write
    )

    out = pl.pallas_call(
        _fused_linear_kernel,
        out_shape=jax.ShapeDtypeStruct((b8, Hp), x.dtype),
        grid=(n_row_tiles,),
        in_specs=[
            pl.BlockSpec((tm, Hp), lambda i: (i, 0)),   # x tile, pipelined over batch
            _resident_spec((Hp, Hp)),                   # fused weight, VMEM-resident
            _resident_spec((1, Hp)),                    # fused bias, VMEM-resident
        ],
        out_specs=pl.BlockSpec((tm, Hp), lambda i: (i, 0)),
        compiler_params=pltpu.CompilerParams(
            dimension_semantics=("parallel",),          # batch tiles shard across TCs (v7x)
            vmem_limit_bytes=vmem_limit,
        ),
        cost_estimate=cost,
    )(xp, params["w"], params["b"])

    return out if (B == b8 and H == Hp) else out[:B, :H]


def _init_linear(key, out_features, in_features, dtype=jnp.float32):
    # Deterministic init mirroring nn.Linear's U(-1/sqrt(in), 1/sqrt(in)).
    kw, kb = jax.random.split(key)
    bound = 1.0 / (in_features ** 0.5)
    w = jax.random.uniform(kw, (out_features, in_features), dtype, -bound, bound)
    b = jax.random.uniform(kb, (out_features,), dtype, -bound, bound)
    return w, b


if __name__ == "__main__":
    hidden = 32
    batch = 8

    key = jax.random.PRNGKey(0)
    kx, k1, k2 = jax.random.split(key, 3)

    x = jax.random.normal(kx, (batch, hidden), dtype=jnp.float32)
    w1, b1 = _init_linear(k1, hidden, hidden)
    w2, b2 = _init_linear(k2, hidden, hidden)

    # Reference in plain JAX (same semantics as the PyTorch Linear chain).
    y_ref = (x @ w1.T + b1) @ w2.T + b2

    # Full-precision path: near-exact numerical check of the fused kernel math.
    params_f32 = prepare_params(w1, b1, w2, b2, compute_dtype=jnp.float32)
    y_f32 = jax.block_until_ready(mlp_forward(x, params_f32))
    assert y_f32.shape == (batch, hidden)
    assert jnp.allclose(y_f32, y_ref, atol=1e-4, rtol=1e-4)

    # bf16 fast path (default): bf16 fused weight on the MXU, f32 accumulation.
    params_bf16 = prepare_params(w1, b1, w2, b2, compute_dtype=jnp.bfloat16)
    y_bf16 = jax.block_until_ready(mlp_forward(x, params_bf16))
    assert y_bf16.shape == (batch, hidden)
    assert jnp.allclose(y_bf16, y_ref, atol=5e-2, rtol=5e-2)

    print("KERNEL_OK")
</pallas_src>

<mosaic_0001>
module attributes {stable_mosaic.version = 11 : i64} {
  func.func @_fused_linear_kernel(%arg0: i32, %arg1: memref<8x128xf32, #tpu.memory_space<vmem>>, %arg2: memref<128x128xf32, #tpu.memory_space<vmem>>, %arg3: memref<1x128xf32, #tpu.memory_space<vmem>>, %arg4: memref<8x128xf32, #tpu.memory_space<vmem>>) attributes {dimension_semantics = [#tpu.dimension_semantics<parallel>], iteration_bounds = array<i64: 1>, scalar_prefetch = 0 : i64, scratch_operands = 0 : i64, tpu.core_type = #tpu.core_type<tc>, window_params = [{transform_indices = @transform_0, window_bounds = array<i64: 8, 128>}, {pipeline_mode = #tpu.pipeline_mode<synchronous>, transform_indices = @transform_1, window_bounds = array<i64: 128, 128>}, {pipeline_mode = #tpu.pipeline_mode<synchronous>, transform_indices = @transform_2, window_bounds = array<i64: 1, 128>}, {transform_indices = @transform_3, window_bounds = array<i64: 8, 128>}]} {
    %c0 = arith.constant 0 : index
    %c0_0 = arith.constant 0 : index
    %0 = vector.load %arg1[%c0, %c0_0] : memref<8x128xf32, #tpu.memory_space<vmem>>, vector<8x128xf32>
    %c0_1 = arith.constant 0 : index
    %c0_2 = arith.constant 0 : index
    %1 = vector.load %arg2[%c0_1, %c0_2] : memref<128x128xf32, #tpu.memory_space<vmem>>, vector<128x128xf32>
    %cst = arith.constant dense<0.000000e+00> : vector<8x128xf32>
    %2 = tpu.matmul %0, %1, %cst {dimension_numbers = #tpu.dot_dimension_numbers<[1], [0], [0], [1], [0, 0, 1, 1], [], []>} : vector<8x128xf32>, vector<128x128xf32>, vector<8x128xf32> -> vector<8x128xf32>
    %c0_3 = arith.constant 0 : index
    %c0_4 = arith.constant 0 : index
    %3 = vector.load %arg3[%c0_3, %c0_4] : memref<1x128xf32, #tpu.memory_space<vmem>>, vector<1x128xf32>
    %4 = vector.broadcast %3 : vector<1x128xf32> to vector<8x128xf32>
    %5 = arith.addf %2, %4 : vector<8x128xf32>
    %c0_5 = arith.constant 0 : index
    %c0_6 = arith.constant 0 : index
    %6 = vector.load %arg4[%c0_5, %c0_6] : memref<8x128xf32, #tpu.memory_space<vmem>>, vector<8x128xf32>
    tpu.vector_store %arg4[%c0_5, %c0_6], %5 {strides = array<i32>} : memref<8x128xf32, #tpu.memory_space<vmem>>, vector<8x128xf32>,
    return
  }
  func.func @transform_0(%arg0: i32) -> (i32, i32) {
    %c0_i32 = arith.constant 0 : i32
    %c0_i32_0 = arith.constant 0 : i32
    return %arg0, %c0_i32 : i32, i32
  }
  func.func @transform_1(%arg0: i32) -> (i32, i32) {
    %c0_i32 = arith.constant 0 : i32
    %c0_i32_0 = arith.constant 0 : i32
    %c0_i32_1 = arith.constant 0 : i32
    return %c0_i32, %c0_i32_0 : i32, i32
  }
  func.func @transform_2(%arg0: i32) -> (i32, i32) {
    %c0_i32 = arith.constant 0 : i32
    %c0_i32_0 = arith.constant 0 : i32
    %c0_i32_1 = arith.constant 0 : i32
    return %c0_i32, %c0_i32_0 : i32, i32
  }
  func.func @transform_3(%arg0: i32) -> (i32, i32) {
    %c0_i32 = arith.constant 0 : i32
    %c0_i32_0 = arith.constant 0 : i32
    return %arg0, %c0_i32 : i32, i32
  }
}

</mosaic_0001>

<llo_original>
// kernel: mlp_forward.1
$region0: #{mlp_forward.1}
  #allocation0 [shape = 'u32[]', space=smem, size = 0x4, offset = 0x4, fixed_abs, tag = 'smem constant byte address 0x4 - core index']
  #allocation1 [shape = 'u32[144,128]{1,0:T(1,128)}', space=vmem, size = 0x12000, scoped, tag = 'internal scratch']
  %s0 = inlined_call_operand.vmem [shape: f32[8,128], index: 0, kind: input, shape index: {}]
  %s1 = inlined_call_operand.hbm [shape: f32[128,128], index: 1, kind: input, shape index: {}]
  %s2 = inlined_call_operand.vmem [shape: f32[1,128], index: 2, kind: input, shape index: {}]
  %s3 = inlined_call_operand.hbm [shape: f32[8,128], index: 3, kind: output, shape index: {}]
  %s4 = sld [smem:[#allocation0]]
  $region26: #{mlp_forward.1} parent=0
    _
  %s6 = ssub.s32 1, %s4
  %s7 = scalar_select 0, %s6, %s4
  $region1: #{mlp_forward.1} parent=0
    #allocation2 [shape = 'u8[65536]{0}', space=vmem, size = 0x10000, scoped, tag = 'input window, operand 1, single buffered']
    #allocation3 [shape = 's32[1]{0}', space=sflag, size = 0x4, scoped, tag = 'scoped memory for mlp_forward.1']
    #allocation4 [shape = 's32[1]{0}', space=sflag, size = 0x4, scoped, tag = 'scoped memory for mlp_forward.1']
    #allocation5 [shape = 'u8[4096]{0}', space=vmem, size = 0x1000, scoped, tag = 'output window, operand 0, single buffered']
    %8 = vsyncpa [#allocation3], 0
    %9 = vsyncpa [#allocation4], 0
    // Predicated region
    $region2: #{mlp_forward.1} parent=1 // pred_check
      _
    $region3: #{mlp_forward.1} parent=1 // pred_check_branch
      %11 = sbr.rel (0) target = $region5
    $region4: #{mlp_forward.1} parent=1 // pred_region
      _
    $region5: #{mlp_forward.1} parent=1 // pred_fallthru
      _
    // Predicated region
    $region6: #{mlp_forward.1} parent=1 // pred_check
      _
    $region7: #{mlp_forward.1} parent=1 // pred_check_branch
      %13 = sbr.rel (0) target = $region9
    $region8: #{mlp_forward.1} parent=1 // pred_region
      %s15 = ssub.s32 2048, 2048
      %16 = vsyncadd [#allocation3], %s15
      %s17 = sshll.u32 [#allocation2], 4
      %s18 = int_to_ptr.vmem [resolvable:$true] %s17
      %23 = dma.hbm_to_vmem [thread:$0]  %s1, 2048, %s18, [#allocation3], 128, 128, 8
    $region9: #{mlp_forward.1} parent=1 // pred_fallthru
      _
    // Predicated region
    $region10: #{mlp_forward.1} parent=1 // pred_check
      _
    $region11: #{mlp_forward.1} parent=1 // pred_check_branch
      %25 = sbr.rel (0) target = $region13
    $region12: #{mlp_forward.1} parent=1 // pred_region
      _
    $region13: #{mlp_forward.1} parent=1 // pred_fallthru
      _
    // Predicated region
    $region14: #{mlp_forward.1} parent=1 // pred_check
      _
    $region15: #{mlp_forward.1} parent=1 // pred_check_branch
      %27 = sbr.rel (0) target = $region17
    $region16: #{mlp_forward.1} parent=1 // pred_region
      %28 = dma.done [#allocation3], 2048
    $region17: #{mlp_forward.1} parent=1 // pred_fallthru
      _
    %v29 = vld [vmem:[%s0] sm:$0xff]
    %v30 = vld [vmem:[#allocation2] sm:$0xff]
    %v31 = vld [vmem:[#allocation2 + $0x8] sm:$0xff]
    %v32 = vld [vmem:[#allocation2 + $0x10] sm:$0xff]
    %v33 = vld [vmem:[#allocation2 + $0x18] sm:$0xff]
    %v34 = vld [vmem:[#allocation2 + $0x20] sm:$0xff]
    %v35 = vld [vmem:[#allocation2 + $0x28] sm:$0xff]
    %v36 = vld [vmem:[#allocation2 + $0x30] sm:$0xff]
    %v37 = vld [vmem:[#allocation2 + $0x38] sm:$0xff]
    %v38 = vld [vmem:[#allocation2 + $0x40] sm:$0xff]
    %v39 = vld [vmem:[#allocation2 + $0x48] sm:$0xff]
    %v40 = vld [vmem:[#allocation2 + $0x50] sm:$0xff]
    %v41 = vld [vmem:[#allocation2 + $0x58] sm:$0xff]
    %v42 = vld [vmem:[#allocation2 + $0x60] sm:$0xff]
    %v43 = vld [vmem:[#allocation2 + $0x68] sm:$0xff]
    %v44 = vld [vmem:[#allocation2 + $0x70] sm:$0xff]
    %v45 = vld [vmem:[#allocation2 + $0x78] sm:$0xff]
    %v46 = vld [vmem:[%s2] sm:$0x1]
    %v48 = vlaneseq
    %v49 = vshrl.u32 %v48, 7
    %v50 = vsub.s32 0, %v49
    %v51 = vrot.slane %v46, %v50
    %53 = vmatprep.subr.mxu0 0.0
    %54 = vmatpush1.msra.mxu0 %v45
    %55 = vmatprep.subr.mxu0 0.0
    %56 = vmatpush1.msra.mxu0 %v44
    %57 = vmatprep.subr.mxu0 0.0
    %58 = vmatpush1.msra.mxu0 %v43
    %59 = vmatprep.subr.mxu0 0.0
    %60 = vmatpush1.msra.mxu0 %v42
    %61 = vmatprep.subr.mxu0 0.0
    %62 = vmatpush1.msra.mxu0 %v41
    %63 = vmatprep.subr.mxu0 0.0
    %64 = vmatpush1.msra.mxu0 %v40
    %65 = vmatprep.subr.mxu0 0.0
    %66 = vmatpush1.msra.mxu0 %v39
    %67 = vmatprep.subr.mxu0 0.0
    %68 = vmatpush1.msra.mxu0 %v38
    %69 = vmatprep.subr.mxu0 0.0
    %70 = vmatpush1.msra.mxu0 %v37
    %71 = vmatprep.subr.mxu0 0.0
    %72 = vmatpush1.msra.mxu0 %v36
    %73 = vmatprep.subr.mxu0 0.0
    %74 = vmatpush1.msra.mxu0 %v35
    %75 = vmatprep.subr.mxu0 0.0
    %76 = vmatpush1.msra.mxu0 %v34
    %77 = vmatprep.subr.mxu0 0.0
    %78 = vmatpush1.msra.mxu0 %v33
    %79 = vmatprep.subr.mxu0 0.0
    %80 = vmatpush1.msra.mxu0 %v32
    %81 = vmatprep.subr.mxu0 0.0
    %82 = vmatpush1.msra.mxu0 %v31
    %83 = vmatprep.subr.mxu0 0.0
    %84 = vmatpush1.msra.mxu0 %v30
    %85 = vmatprep.subr.mxu0 0.0
    %86 = vmatpush2.msra.mxu0 0.0
    %87 = vmatprep.subr.mxu0 0.0
    %88 = vmatpush2.msra.mxu0 0.0
    %89 = vmatprep.subr.mxu0 0.0
    %90 = vmatpush2.msra.mxu0 0.0
    %91 = vmatprep.subr.mxu0 0.0
    %92 = vmatpush2.msra.mxu0 0.0
    %93 = vmatprep.subr.mxu0 0.0
    %94 = vmatpush2.msra.mxu0 0.0
    %95 = vmatprep.subr.mxu0 0.0
    %96 = vmatpush2.msra.mxu0 0.0
    %97 = vmatprep.subr.mxu0 0.0
    %98 = vmatpush2.msra.mxu0 0.0
    %99 = vmatprep.subr.mxu0 0.0
    %100 = vmatpush2.msra.mxu0 0.0
    %101 = vmatprep.subr.mxu0 0.0
    %102 = vmatpush2.msra.mxu0 0.0
    %103 = vmatprep.subr.mxu0 0.0
    %104 = vmatpush2.msra.mxu0 0.0
    %105 = vmatprep.subr.mxu0 0.0
    %106 = vmatpush2.msra.mxu0 0.0
    %107 = vmatprep.subr.mxu0 0.0
    %108 = vmatpush2.msra.mxu0 0.0
    %109 = vmatprep.subr.mxu0 0.0
    %110 = vmatpush2.msra.mxu0 0.0
    %111 = vmatprep.subr.mxu0 0.0
    %112 = vmatpush2.msra.mxu0 0.0
    %113 = vmatprep.subr.mxu0 0.0
    %114 = vmatpush2.msra.mxu0 0.0
    %115 = vmatprep.subr.mxu0 0.0
    %116 = vmatpush2.msra.mxu0 0.0
    %117 = vmatprep.mubr.f32.mxu0 0.0
    %118 = vmatmul.mubr.f32.gmra.mxu0 %v29
    %v119 = vpop.f32.mrf.mxu0
    %v120 = vadd.f32 %v51, %v119
    %v121 = vpop.f32.mrf.mxu0
    %122 = vdwg.mxu0
    %123 = vst [vmem:[#allocation5] sm:$0xff] %v120
    // Predicated region
    $region18: #{mlp_forward.1} parent=1 // pred_check
      _
    $region19: #{mlp_forward.1} parent=1 // pred_check_branch
      %125 = sbr.rel (0) target = $region21
    $region20: #{mlp_forward.1} parent=1 // pred_region
      %s127 = ssub.s32 128, 128
      %128 = vsyncadd [#allocation4], %s127
      %s130 = sshll.u32 [#allocation5], 4
      %s131 = int_to_ptr.vmem [resolvable:$true] %s130
      %133 = dma.vmem_to_hbm [thread:$0]  %s131, 128, %s3, [#allocation4]
    $region21: #{mlp_forward.1} parent=1 // pred_fallthru
      _
    // Predicated region
    $region22: #{mlp_forward.1} parent=1 // pred_check
      _
    $region23: #{mlp_forward.1} parent=1 // pred_check_branch
      %135 = sbr.rel (0) target = $region25
    $region24: #{mlp_forward.1} parent=1 // pred_region
      %136 = dma.done [#allocation4], 128
    $region25: #{mlp_forward.1} parent=1 // pred_fallthru
      _
    %137 = vsyncpa [#allocation3], 1
    %138 = vsyncpa [#allocation4], 1

</llo_original>
